<compile_context>
chip_gen: v6e
topology: v6e:2x2x1
jax: 0.10.0
libtpu: 0.0.40
codegen_flags: <defaults>
</compile_context>

<pallas_src>
import math

import jax
import jax.numpy as jnp
from jax.experimental import pallas as pl
from jax.experimental.pallas import tpu as pltpu


def _round_up(x, m):
    return ((x + m - 1) // m) * m


# --------------------------------------------------------------------------
# Stage 1: hidden = text @ weight   (computed once per batch, tiled over rows)
# --------------------------------------------------------------------------
def _hidden_kernel(text_ref, w_ref, h_ref):
    # text_ref: (1, TM, F_in_p) f32, w_ref: (F_in_p, F_out_p) f32,
    # h_ref: (1, TM, F_out_p) f32
    h_ref[0] = jnp.dot(text_ref[0], w_ref[...],
                       preferred_element_type=jnp.float32)


def _compute_hidden(text_p, weight_p, tm):
    B, n_p, f_in_p = text_p.shape
    f_out_p = weight_p.shape[1]
    return pl.pallas_call(
        _hidden_kernel,
        out_shape=jax.ShapeDtypeStruct((B, n_p, f_out_p), jnp.float32),
        grid_spec=pltpu.PrefetchScalarGridSpec(
            num_scalar_prefetch=0,
            grid=(B, n_p // tm),
            in_specs=[
                pl.BlockSpec((1, tm, f_in_p), lambda b, m: (b, m, 0)),
                pl.BlockSpec((f_in_p, f_out_p), lambda b, m: (0, 0)),
            ],
            out_specs=pl.BlockSpec((1, tm, f_out_p), lambda b, m: (b, m, 0)),
        ),
        compiler_params=pltpu.CompilerParams(
            dimension_semantics=("parallel", "parallel")),
    )(text_p, weight_p)


# --------------------------------------------------------------------------
# Stage 2: out = (clamp(adj1+adj2) @ hidden) / rowsum + bias, tiled reduction
# --------------------------------------------------------------------------
def _gcn_agg_kernel(adj1_ref, adj2_ref, h_ref, b_ref, out_ref, acc_ref, rs_ref):
    # adj*_ref: (1, TM, TK) bf16; h_ref: (1, TK, F_out_p) f32;
    # b_ref: (1, F_out_p) f32; out_ref: (1, TM, F_out_p) f32
    # acc_ref: (TM, F_out_p) f32 scratch; rs_ref: (TM, 1) f32 scratch
    k = pl.program_id(2)

    @pl.when(k == 0)
    def _init():
        acc_ref[...] = jnp.zeros_like(acc_ref)
        rs_ref[...] = jnp.zeros_like(rs_ref)

    # bf16 adjacency values {0,1} are exact; upcast, fuse, clamp (adj[adj>=1]=1).
    adj = jnp.minimum(
        adj1_ref[0].astype(jnp.float32) + adj2_ref[0].astype(jnp.float32), 1.0)

    acc_ref[...] += jnp.dot(adj, h_ref[0], preferred_element_type=jnp.float32)
    rs_ref[...] += jnp.sum(adj, axis=1, keepdims=True)

    @pl.when(k == pl.num_programs(2) - 1)
    def _finalize():
        inv = pl.reciprocal(rs_ref[...] + 1e-07, approx=False)   # exact 1/denom
        out_ref[0] = (acc_ref[...] * inv + b_ref[...]).astype(out_ref.dtype)


def _gcn_aggregate(adj1_p, adj2_p, hidden_p, bias2d, tm, tk):
    B, n_p, _ = adj1_p.shape
    f_out_p = hidden_p.shape[2]
    return pl.pallas_call(
        _gcn_agg_kernel,
        out_shape=jax.ShapeDtypeStruct((B, n_p, f_out_p), jnp.float32),
        grid_spec=pltpu.PrefetchScalarGridSpec(
            num_scalar_prefetch=0,
            grid=(B, n_p // tm, n_p // tk),           # K reduction axis last
            in_specs=[
                pl.BlockSpec((1, tm, tk), lambda b, m, k: (b, m, k)),
                pl.BlockSpec((1, tm, tk), lambda b, m, k: (b, m, k)),
                pl.BlockSpec((1, tk, f_out_p), lambda b, m, k: (b, k, 0)),
                pl.BlockSpec((1, f_out_p), lambda b, m, k: (0, 0)),
            ],
            out_specs=pl.BlockSpec((1, tm, f_out_p), lambda b, m, k: (b, m, 0)),
            scratch_shapes=[
                pltpu.VMEM((tm, f_out_p), jnp.float32),
                pltpu.VMEM((tm, 1), jnp.float32),
            ],
        ),
        compiler_params=pltpu.CompilerParams(
            dimension_semantics=("parallel", "parallel", "arbitrary"),
            vmem_limit_bytes=32 * 1024 * 1024),
    )(adj1_p, adj2_p, hidden_p, bias2d)


# --------------------------------------------------------------------------
# Public wrapper
# --------------------------------------------------------------------------
def graph_convolution(text, adj1, adj2, weight, bias, *, adj_tile=512,
                      adj_dtype=jnp.bfloat16):
    """GCN forward.  adj_dtype=bf16 is exact for {0,1} adjacency matrices; pass
    jnp.float32 instead if the adjacency carries fractional weights < 1."""
    B, N, f_in = text.shape
    f_out = weight.shape[1]

    adj_tile = _round_up(adj_tile, 128)
    f_in_p = _round_up(f_in, 128)
    f_out_p = _round_up(f_out, 128)
    if N <= adj_tile:                       # single tile covers all nodes
        n_p = _round_up(N, 128)
        tm = tk = n_p
    else:                                   # tile the node dimension
        n_p = _round_up(N, adj_tile)
        tm = tk = adj_tile

    # Zero padding: padded rows/cols contribute 0 to matmuls and row-sums, and
    # the padded output region is sliced off below.
    text_p = jnp.pad(text.astype(jnp.float32),
                     ((0, 0), (0, n_p - N), (0, f_in_p - f_in)))
    adj1_p = jnp.pad(adj1, ((0, 0), (0, n_p - N), (0, n_p - N))).astype(adj_dtype)
    adj2_p = jnp.pad(adj2, ((0, 0), (0, n_p - N), (0, n_p - N))).astype(adj_dtype)
    weight_p = jnp.pad(weight.astype(jnp.float32),
                       ((0, f_in_p - f_in), (0, f_out_p - f_out)))
    bias2d = jnp.pad(bias.astype(jnp.float32),
                     (0, f_out_p - f_out)).reshape(1, f_out_p)

    hidden_p = _compute_hidden(text_p, weight_p, tm)          # (B, n_p, f_out_p)
    out_p = _gcn_aggregate(adj1_p, adj2_p, hidden_p, bias2d, tm, tk)
    return out_p[:, :N, :f_out]


def reference_forward(text, adj1, adj2, weight, bias):
    # Pure-JAX reference mirroring the PyTorch forward.
    adj = adj1 + adj2
    adj = jnp.where(adj >= 1.0, 1.0, adj)
    hidden = jnp.matmul(text, weight)
    denom = jnp.sum(adj, axis=2, keepdims=True) + 1e-07
    return jnp.matmul(adj, hidden) / denom + bias


def _make_inputs(key, B, N, f_in, f_out):
    k_text, k_a1, k_a2, k_w, k_b = jax.random.split(key, 5)
    text = jax.random.normal(k_text, (B, N, f_in), dtype=jnp.float32)
    # Binary adjacency matrices; their sum exercises the "adj[adj >= 1] = 1" clamp.
    adj1 = (jax.random.uniform(k_a1, (B, N, N)) > 0.5).astype(jnp.float32)
    adj2 = (jax.random.uniform(k_a2, (B, N, N)) > 0.5).astype(jnp.float32)
    # Parameter init matching the module's __init__ (xavier_uniform_, uniform bias).
    xavier_bound = math.sqrt(6.0 / (f_in + f_out))
    weight = jax.random.uniform(k_w, (f_in, f_out), dtype=jnp.float32,
                                minval=-xavier_bound, maxval=xavier_bound)
    stdv = 1.0 / math.sqrt(f_out)
    bias = jax.random.uniform(k_b, (f_out,), dtype=jnp.float32,
                              minval=-stdv, maxval=stdv)
    return text, adj1, adj2, weight, bias


if __name__ == "__main__":
    key = jax.random.PRNGKey(0)
    k1, k2 = jax.random.split(key)

    # Case 1: small module-consistent shapes (single tile, padded to 128).
    B, N, f_in, f_out = 2, 16, 32, 32
    text, adj1, adj2, weight, bias = _make_inputs(k1, B, N, f_in, f_out)
    out = jax.block_until_ready(graph_convolution(text, adj1, adj2, weight, bias))
    ref = reference_forward(text, adj1, adj2, weight, bias)
    assert out.shape == (B, N, f_out)
    assert jnp.allclose(out, ref, atol=1e-5, rtol=1e-5), "mismatch vs reference (case 1)"

    # Case 2: force multi-tile M/K accumulation + non-128 feature dims (still small).
    B, N, f_in, f_out = 2, 300, 48, 40
    text, adj1, adj2, weight, bias = _make_inputs(k2, B, N, f_in, f_out)
    out = jax.block_until_ready(
        graph_convolution(text, adj1, adj2, weight, bias, adj_tile=128))
    ref = reference_forward(text, adj1, adj2, weight, bias)
    assert out.shape == (B, N, f_out)
    assert jnp.allclose(out, ref, atol=1e-5, rtol=1e-5), "mismatch vs reference (case 2)"

    print("KERNEL_OK")
</pallas_src>

<mosaic_0001>
module attributes {stable_mosaic.version = 11 : i64} {
  func.func @_hidden_kernel(%arg0: i32, %arg1: i32, %arg2: memref<1x128x128xf32, #tpu.memory_space<vmem>>, %arg3: memref<128x128xf32, #tpu.memory_space<vmem>>, %arg4: memref<1x128x128xf32, #tpu.memory_space<vmem>>) attributes {dimension_semantics = [#tpu.dimension_semantics<parallel>, #tpu.dimension_semantics<parallel>], iteration_bounds = array<i64: 2, 1>, scalar_prefetch = 0 : i64, scratch_operands = 0 : i64, tpu.core_type = #tpu.core_type<tc>, window_params = [{transform_indices = @transform_0, window_bounds = array<i64: 1, 128, 128>}, {pipeline_mode = #tpu.pipeline_mode<synchronous>, transform_indices = @transform_1, window_bounds = array<i64: 128, 128>}, {transform_indices = @transform_2, window_bounds = array<i64: 1, 128, 128>}]} {
    %c0 = arith.constant 0 : index
    %c0_0 = arith.constant 0 : index
    %c0_1 = arith.constant 0 : index
    %0 = vector.load %arg2[%c0, %c0_0, %c0_1] : memref<1x128x128xf32, #tpu.memory_space<vmem>>, vector<1x128x128xf32>
    %1 = vector.shape_cast %0 : vector<1x128x128xf32> to vector<128x128xf32>
    %c0_2 = arith.constant 0 : index
    %c0_3 = arith.constant 0 : index
    %2 = vector.load %arg3[%c0_2, %c0_3] : memref<128x128xf32, #tpu.memory_space<vmem>>, vector<128x128xf32>
    %cst = arith.constant dense<0.000000e+00> : vector<128x128xf32>
    %3 = tpu.matmul %1, %2, %cst {dimension_numbers = #tpu.dot_dimension_numbers<[1], [0], [0], [1], [0, 0, 1, 1], [], []>} : vector<128x128xf32>, vector<128x128xf32>, vector<128x128xf32> -> vector<128x128xf32>
    %c0_4 = arith.constant 0 : index
    %c0_5 = arith.constant 0 : index
    %c0_6 = arith.constant 0 : index
    %4 = vector.load %arg4[%c0_4, %c0_5, %c0_6] : memref<1x128x128xf32, #tpu.memory_space<vmem>>, vector<1x128x128xf32>
    %5 = vector.shape_cast %4 : vector<1x128x128xf32> to vector<128x128xf32>
    %6 = vector.shape_cast %3 : vector<128x128xf32> to vector<1x128x128xf32>
    tpu.vector_store %arg4[%c0_4, %c0_5, %c0_6], %6 {strides = array<i32>} : memref<1x128x128xf32, #tpu.memory_space<vmem>>, vector<1x128x128xf32>,
    return
  }
  func.func @transform_0(%arg0: i32, %arg1: i32) -> (i32, i32, i32) {
    %c0_i32 = arith.constant 0 : i32
    %c0_i32_0 = arith.constant 0 : i32
    return %arg0, %arg1, %c0_i32 : i32, i32, i32
  }
  func.func @transform_1(%arg0: i32, %arg1: i32) -> (i32, i32) {
    %c0_i32 = arith.constant 0 : i32
    %c0_i32_0 = arith.constant 0 : i32
    %c0_i32_1 = arith.constant 0 : i32
    return %c0_i32, %c0_i32_0 : i32, i32
  }
  func.func @transform_2(%arg0: i32, %arg1: i32) -> (i32, i32, i32) {
    %c0_i32 = arith.constant 0 : i32
    %c0_i32_0 = arith.constant 0 : i32
    return %arg0, %arg1, %c0_i32 : i32, i32, i32
  }
}

</mosaic_0001>

<llo_original>
// kernel: tpu_custom_call.1
$region0: #{tpu_custom_call.1}
  #allocation0 [shape = 'u32[]', space=smem, size = 0x4, offset = 0x4, fixed_abs, tag = 'smem constant byte address 0x4 - core index']
  #allocation1 [shape = 'u32[144,128]{1,0:T(1,128)}', space=vmem, size = 0x12000, scoped, tag = 'internal scratch']
  %s0 = inlined_call_operand.hbm [shape: f32[2,128,128], index: 0, kind: input, shape index: {}]
  %s1 = inlined_call_operand.hbm [shape: f32[128,128], index: 1, kind: input, shape index: {}]
  %s2 = inlined_call_operand.hbm [shape: f32[2,128,128], index: 2, kind: output, shape index: {}]
  %s3 = sld [smem:[#allocation0]]
  $region49: #{tpu_custom_call.1} parent=0
    _
  %s5 = ssub.s32 1, %s3
  %s6 = scalar_select 0, %s5, %s3
  $region1: #{tpu_custom_call.1} parent=0
    #allocation2 [shape = 'u8[131072]{0}', space=vmem, size = 0x20000, scoped, tag = 'input window, operand 0']
    #allocation3 [shape = 's32[2]{0}', space=sflag, size = 0x8, scoped, tag = 'scoped memory for tpu_custom_call.1']
    #allocation4 [shape = 's32[2]{0}', space=sflag, size = 0x8, scoped, tag = 'scoped memory for tpu_custom_call.1']
    #allocation5 [shape = 'u8[65536]{0}', space=vmem, size = 0x10000, scoped, tag = 'input window, operand 1, single buffered']
    #allocation6 [shape = 's32[1]{0}', space=sflag, size = 0x4, scoped, tag = 'scoped memory for tpu_custom_call.1']
    #allocation7 [shape = 'u8[131072]{0}', space=vmem, size = 0x20000, scoped, tag = 'output window, operand 0']
    %7 = vsyncpa [#allocation3], 0
    %s8 = scalar_lea.sflag [#allocation3], 1
    %9 = vsyncpa %s8, 0
    %10 = vsyncpa [#allocation6], 0
    %11 = vsyncpa [#allocation4], 0
    %s12 = scalar_lea.sflag [#allocation4], 1
    %13 = vsyncpa %s12, 0
    loop: start=0, step=1, limit=4
    $region2: #{tpu_custom_call.1} parent=1 // loop_pre_header
      _
    $region3: #{tpu_custom_call.1} parent=1 // loop_header
      %s15 = sphi 0, %s19
      %p16 = scmp.ge.s32.totalorder %s15, 4
      %s22 = sphi 0, %s34
      %s23 = sphi 0, %s30
      %s24 = sphi 0, %s22
      %s25 = sphi 0, %s23
      %s26 = sphi 0, %s24
      %s27 = sphi 0, %s25
      %s39 = sphi 0, %s41
      %s42 = sphi 0, %s39
      %s43 = sphi 0, %s42
      %s59 = sphi 0, %s43
      %s63 = sphi 0, %s63
      %s65 = sphi 0, %s63
      %s66 = sphi 0, %s65
      %s80 = sphi 0, %s66
      %s88 = sphi 0, %s90
      %s91 = sphi 0, %s88
      %s92 = sphi 0, %s91
      %s108 = sphi 0, %s92
    $region4: #{tpu_custom_call.1} parent=1 // loop_header_branch
      %18 = sbr.rel (%p16) target = $region8
    $region5: #{tpu_custom_call.1} parent=1 // loop_body
      %s20 = ssub.s32 %s15, 1
      %s21 = ssub.s32 %s15, 2
      %s28 = sadd.s32 1, %s23
      %p29 = scmp.ge.s32.totalorder %s28, 1
      %s30 = scalar_select %p29, 0, %s28
      %s31 = sadd.s32 1, %s22
      %s32 = scalar_select %p29, %s31, %s22
      %p33 = scmp.ge.s32.totalorder %s32, 2
      %s34 = scalar_select %p33, 0, %s32
      %s35 = ssub.s32 %s22, %s34
      %s36 = ssub.s32 %s23, %s30
      %s37 = sor.u32 %s35, %s36
      %p38 = scmp.eq.s32.totalorder %s37, 0
      %s40 = sadd.s32 %s39, 1
      %s41 = scalar_select %p38, %s39, %s40
      %p44 = pneg %p38
      %p45 = scmp.eq.s32.totalorder %s15, 1
      %p46 = por %p44, %p45
      %p47 = scmp.ne.s32.totalorder %s39, %s42
      %p48 = scmp.eq.s32.totalorder %s15, 0
      %p49 = por %p47, %p48
      %p50 = scmp.ne.s32.totalorder %s39, %s42
      %p51 = scmp.eq.s32.totalorder %s20, 1
      %p52 = por %p50, %p51
      %p53 = scmp.ne.s32.totalorder %s42, %s43
      %p54 = scmp.eq.s32.totalorder %s20, 0
      %p55 = por %p53, %p54
      %p56 = scmp.ne.s32.totalorder %s42, %s43
      %p57 = scmp.eq.s32.totalorder %s21, 1
      %p58 = por %p56, %p57
      %p60 = scmp.ne.s32.totalorder %s43, %s59
      %p61 = scmp.eq.s32.totalorder %s21, 0
      %p62 = por %p60, %p61
      %s64 = sadd.s32 %s63, 1
      %p67 = scmp.eq.s32.totalorder %s15, 1
      %p68 = scmp.ne.s32.totalorder %s63, %s65
      %p69 = scmp.eq.s32.totalorder %s15, 0
      %p70 = por %p68, %p69
      %p71 = scmp.ne.s32.totalorder %s63, %s65
      %p72 = scmp.eq.s32.totalorder %s20, 1
      %p73 = por %p71, %p72
      %p74 = scmp.ne.s32.totalorder %s65, %s66
      %p75 = scmp.eq.s32.totalorder %s20, 0
      %p76 = por %p74, %p75
      %p77 = scmp.ne.s32.totalorder %s65, %s66
      %p78 = scmp.eq.s32.totalorder %s21, 1
      %p79 = por %p77, %p78
      %p81 = scmp.ne.s32.totalorder %s66, %s80
      %p82 = scmp.eq.s32.totalorder %s21, 0
      %p83 = por %p81, %p82
      %s84 = ssub.s32 %s22, %s34
      %s85 = ssub.s32 %s23, %s30
      %s86 = sor.u32 %s84, %s85
      %p87 = scmp.eq.s32.totalorder %s86, 0
      %s89 = sadd.s32 %s88, 1
      %s90 = scalar_select %p87, %s88, %s89
      %p93 = pneg %p87
      %p94 = scmp.eq.s32.totalorder %s15, 1
      %p95 = por %p93, %p94
      %p96 = scmp.ne.s32.totalorder %s88, %s91
      %p97 = scmp.eq.s32.totalorder %s15, 0
      %p98 = por %p96, %p97
      %p99 = scmp.ne.s32.totalorder %s88, %s91
      %p100 = scmp.eq.s32.totalorder %s20, 1
      %p101 = por %p99, %p100
      %p102 = scmp.ne.s32.totalorder %s91, %s92
      %p103 = scmp.eq.s32.totalorder %s20, 0
      %p104 = por %p102, %p103
      %p105 = scmp.ne.s32.totalorder %s91, %s92
      %p106 = scmp.eq.s32.totalorder %s21, 1
      %p107 = por %p105, %p106
      %p109 = scmp.ne.s32.totalorder %s92, %s108
      %p110 = scmp.eq.s32.totalorder %s21, 0
      %p111 = por %p109, %p110
      %p112 = scmp.le.s32.totalorder 1, %s15
      %p113 = scmp.lt.s32.totalorder %s15, 3
      %p114 = pnand %p112, %p113
      %p115 = pneg %p114
      // Predicated region
      $region9: #{tpu_custom_call.1} parent=5 // pred_check
        _
      $region10: #{tpu_custom_call.1} parent=5 // pred_check_branch
        %117 = sbr.rel (%p114) target = $region12
      $region11: #{tpu_custom_call.1} parent=5 // pred_region
        %s118 = ssub.s32 %s15, 1
        // Predicated region
        $region13: #{tpu_custom_call.1} parent=11 // pred_check
          %p119 = pneg %p76
        $region14: #{tpu_custom_call.1} parent=11 // pred_check_branch
          %121 = sbr.rel (%p119) target = $region16
        $region15: #{tpu_custom_call.1} parent=11 // pred_region
          %s123 = ssub.s32 2048, 2048
          %124 = vsyncadd [#allocation6], %s123
          %s125 = sshll.u32 [#allocation5], 4
          %s126 = int_to_ptr.vmem [resolvable:$true] %s125
          %131 = dma.hbm_to_vmem [thread:$0]  %s1, 2048, %s126, [#allocation6], 128, 128, 8
        $region16: #{tpu_custom_call.1} parent=11 // pred_fallthru
          _
      $region12: #{tpu_custom_call.1} parent=5 // pred_fallthru
        _
      %p132 = scmp.lt.s32.totalorder %s15, 2
      // Predicated region
      $region17: #{tpu_custom_call.1} parent=5 // pred_check
        %p133 = pneg %p132
      $region18: #{tpu_custom_call.1} parent=5 // pred_check_branch
        %135 = sbr.rel (%p133) target = $region20
      $region19: #{tpu_custom_call.1} parent=5 // pred_region
        // Predicated region
        $region21: #{tpu_custom_call.1} parent=19 // pred_check
          %p136 = pneg %p49
        $region22: #{tpu_custom_call.1} parent=19 // pred_check_branch
          %138 = sbr.rel (%p136) target = $region24
        $region23: #{tpu_custom_call.1} parent=19 // pred_region
          %s139 = sand.u32 %s39, 1
          %s140 = scalar_lea.sflag [#allocation3], %s139
          %s141 = sand.u32 %s39, 1
          %s142 = smul.addr %s141, 128
          %s143 = scalar_lea.vmem [#allocation2], %s142
          %s144 = smul.u32 16, %s23
          %s146 = ssub.s32 2048, 2048
          %147 = vsyncadd %s140, %s146
          %s148 = smul.addr %s22, 16
          %s149 = sadd.s32 %s144, %s148
          %s150 = smul.addr %s149, 128
          %s151 = scalar_lea.hbm %s0, %s150
          %s152 = sshll.u32 %s143, 4
          %s153 = int_to_ptr.vmem [resolvable:$true] %s152
          %158 = dma.hbm_to_vmem [thread:$0]  %s151, 2048, %s153, %s140, 128, 128, 8
        $region24: #{tpu_custom_call.1} parent=19 // pred_fallthru
          _
      $region20: #{tpu_custom_call.1} parent=5 // pred_fallthru
        _
      %p159 = scmp.le.s32.totalorder 1, %s15
      %p160 = scmp.lt.s32.totalorder %s15, 3
      %p161 = pnand %p159, %p160
      %p162 = pneg %p161
      // Predicated region
      $region25: #{tpu_custom_call.1} parent=5 // pred_check
        _
      $region26: #{tpu_custom_call.1} parent=5 // pred_check_branch
        %164 = sbr.rel (%p161) target = $region28
      $region27: #{tpu_custom_call.1} parent=5 // pred_region
        %s165 = ssub.s32 %s15, 1
        %s166 = sand.u32 %s42, 1
        %s167 = scalar_lea.sflag [#allocation3], %s166
        %s168 = sand.u32 %s42, 1
        %s169 = smul.addr %s168, 128
        %s170 = scalar_lea.vmem [#allocation2], %s169
        // Predicated region
        $region29: #{tpu_custom_call.1} parent=27 // pred_check
          %p171 = pneg %p55
        $region30: #{tpu_custom_call.1} parent=27 // pred_check_branch
          %173 = sbr.rel (%p171) target = $region32
        $region31: #{tpu_custom_call.1} parent=27 // pred_region
          %174 = dma.done %s167, 2048
        $region32: #{tpu_custom_call.1} parent=27 // pred_fallthru
          _
        // Predicated region
        $region33: #{tpu_custom_call.1} parent=27 // pred_check
          %p175 = pneg %p76
        $region34: #{tpu_custom_call.1} parent=27 // pred_check_branch
          %177 = sbr.rel (%p175) target = $region36
        $region35: #{tpu_custom_call.1} parent=27 // pred_region
          %178 = dma.done [#allocation6], 2048
        $region36: #{tpu_custom_call.1} parent=27 // pred_fallthru
          _
        %s179 = sand.u32 %s42, 1
        %s180 = scalar_lea.sflag [#allocation3], %s179
        %s181 = sand.u32 %s42, 1
        %s182 = smul.addr %s181, 128
        %s183 = scalar_lea.vmem [#allocation2], %s182
        %p184 = pneg %p55
        %p185 = pneg %p52
        %p186 = pneg %p76
        %p187 = pneg %p73
        %p188 = pneg %p104
        %p189 = pneg %p101
        %s190 = sand.u32 %s91, 1
        %s191 = scalar_lea.sflag [#allocation4], %s190
        %s192 = sand.u32 %s91, 1
        %s193 = smul.addr %s192, 128
        %s194 = scalar_lea.vmem [#allocation7], %s193
        %s195 = smul.u32 16, %s25
        %s196 = smul.u32 16, %s25
        %v197 = vld [vmem:[%s170] sm:$0xff]
        %v198 = vld [vmem:[%s170 + $0x8] sm:$0xff]
        %v199 = vld [vmem:[%s170 + $0x10] sm:$0xff]
        %v200 = vld [vmem:[%s170 + $0x18] sm:$0xff]
        %v201 = vld [vmem:[%s170 + $0x20] sm:$0xff]
        %v202 = vld [vmem:[%s170 + $0x28] sm:$0xff]
        %v203 = vld [vmem:[%s170 + $0x30] sm:$0xff]
        %v204 = vld [vmem:[%s170 + $0x38] sm:$0xff]
        %v205 = vld [vmem:[%s170 + $0x40] sm:$0xff]
        %v206 = vld [vmem:[%s170 + $0x48] sm:$0xff]
        %v207 = vld [vmem:[%s170 + $0x50] sm:$0xff]
        %v208 = vld [vmem:[%s170 + $0x58] sm:$0xff]
        %v209 = vld [vmem:[%s170 + $0x60] sm:$0xff]
        %v210 = vld [vmem:[%s170 + $0x68] sm:$0xff]
        %v211 = vld [vmem:[%s170 + $0x70] sm:$0xff]
        %v212 = vld [vmem:[%s170 + $0x78] sm:$0xff]
        %v213 = vld [vmem:[#allocation5] sm:$0xff]
        %v214 = vld [vmem:[#allocation5 + $0x8] sm:$0xff]
        %v215 = vld [vmem:[#allocation5 + $0x10] sm:$0xff]
        %v216 = vld [vmem:[#allocation5 + $0x18] sm:$0xff]
        %v217 = vld [vmem:[#allocation5 + $0x20] sm:$0xff]
        %v218 = vld [vmem:[#allocation5 + $0x28] sm:$0xff]
        %v219 = vld [vmem:[#allocation5 + $0x30] sm:$0xff]
        %v220 = vld [vmem:[#allocation5 + $0x38] sm:$0xff]
        %v221 = vld [vmem:[#allocation5 + $0x40] sm:$0xff]
        %v222 = vld [vmem:[#allocation5 + $0x48] sm:$0xff]
        %v223 = vld [vmem:[#allocation5 + $0x50] sm:$0xff]
        %v224 = vld [vmem:[#allocation5 + $0x58] sm:$0xff]
        %v225 = vld [vmem:[#allocation5 + $0x60] sm:$0xff]
        %v226 = vld [vmem:[#allocation5 + $0x68] sm:$0xff]
        %v227 = vld [vmem:[#allocation5 + $0x70] sm:$0xff]
        %v228 = vld [vmem:[#allocation5 + $0x78] sm:$0xff]
        %229 = vmatprep.subr.mxu0 0.0
        %230 = vmatpush1.msra.mxu0 %v228
        %231 = vmatprep.subr.mxu0 0.0
        %232 = vmatpush1.msra.mxu0 %v227
        %233 = vmatprep.subr.mxu0 0.0
        %234 = vmatpush1.msra.mxu0 %v226
        %235 = vmatprep.subr.mxu0 0.0
        %236 = vmatpush1.msra.mxu0 %v225
        %237 = vmatprep.subr.mxu0 0.0
        %238 = vmatpush1.msra.mxu0 %v224
        %239 = vmatprep.subr.mxu0 0.0
        %240 = vmatpush1.msra.mxu0 %v223
        %241 = vmatprep.subr.mxu0 0.0
        %242 = vmatpush1.msra.mxu0 %v222
        %243 = vmatprep.subr.mxu0 0.0
        %244 = vmatpush1.msra.mxu0 %v221
        %245 = vmatprep.subr.mxu0 0.0
        %246 = vmatpush1.msra.mxu0 %v220
        %247 = vmatprep.subr.mxu0 0.0
        %248 = vmatpush1.msra.mxu0 %v219
        %249 = vmatprep.subr.mxu0 0.0
        %250 = vmatpush1.msra.mxu0 %v218
        %251 = vmatprep.subr.mxu0 0.0
        %252 = vmatpush1.msra.mxu0 %v217
        %253 = vmatprep.subr.mxu0 0.0
        %254 = vmatpush1.msra.mxu0 %v216
        %255 = vmatprep.subr.mxu0 0.0
        %256 = vmatpush1.msra.mxu0 %v215
        %257 = vmatprep.subr.mxu0 0.0
        %258 = vmatpush1.msra.mxu0 %v214
        %259 = vmatprep.subr.mxu0 0.0
        %260 = vmatpush1.msra.mxu0 %v213
        %261 = vmatprep.subr.mxu0 0.0
        %262 = vmatpush2.msra.mxu0 0.0
        %263 = vmatprep.subr.mxu0 0.0
        %264 = vmatpush2.msra.mxu0 0.0
        %265 = vmatprep.subr.mxu0 0.0
        %266 = vmatpush2.msra.mxu0 0.0
        %267 = vmatprep.subr.mxu0 0.0
        %268 = vmatpush2.msra.mxu0 0.0
        %269 = vmatprep.subr.mxu0 0.0
        %270 = vmatpush2.msra.mxu0 0.0
        %271 = vmatprep.subr.mxu0 0.0
        %272 = vmatpush2.msra.mxu0 0.0
        %273 = vmatprep.subr.mxu0 0.0
        %274 = vmatpush2.msra.mxu0 0.0
        %275 = vmatprep.subr.mxu0 0.0
        %276 = vmatpush2.msra.mxu0 0.0
        %277 = vmatprep.subr.mxu0 0.0
        %278 = vmatpush2.msra.mxu0 0.0
        %279 = vmatprep.subr.mxu0 0.0
        %280 = vmatpush2.msra.mxu0 0.0
        %281 = vmatprep.subr.mxu0 0.0
        %282 = vmatpush2.msra.mxu0 0.0
        %283 = vmatprep.subr.mxu0 0.0
        %284 = vmatpush2.msra.mxu0 0.0
        %285 = vmatprep.subr.mxu0 0.0
        %286 = vmatpush2.msra.mxu0 0.0
        %287 = vmatprep.subr.mxu0 0.0
        %288 = vmatpush2.msra.mxu0 0.0
        %289 = vmatprep.subr.mxu0 0.0
        %290 = vmatpush2.msra.mxu0 0.0
        %291 = vmatprep.subr.mxu0 0.0
        %292 = vmatpush2.msra.mxu0 0.0
        %293 = vmatprep.mubr.f32.mxu0 0.0
        %294 = vmatmul.mubr.f32.gmra.mxu0 %v197
        %v295 = vpop.f32.mrf.mxu0
        %v296 = vadd.f32 0.0, %v295
        %v297 = vpop.f32.mrf.mxu0
        %298 = vmatprep.mubr.f32.mxu0 0.0
        %299 = vmatmul.mubr.f32.gmra.mxu0 %v198
        %v300 = vpop.f32.mrf.mxu0
        %v301 = vadd.f32 0.0, %v300
        %v302 = vpop.f32.mrf.mxu0
        %303 = vmatprep.mubr.f32.mxu0 0.0
        %304 = vmatmul.mubr.f32.gmra.mxu0 %v199
        %v305 = vpop.f32.mrf.mxu0
        %v306 = vadd.f32 0.0, %v305
        %v307 = vpop.f32.mrf.mxu0
        %308 = vmatprep.mubr.f32.mxu0 0.0
        %309 = vmatmul.mubr.f32.gmra.mxu0 %v200
        %v310 = vpop.f32.mrf.mxu0
        %v311 = vadd.f32 0.0, %v310
        %v312 = vpop.f32.mrf.mxu0
        %313 = vmatprep.mubr.f32.mxu0 0.0
        %314 = vmatmul.mubr.f32.gmra.mxu0 %v201
        %v315 = vpop.f32.mrf.mxu0
        %v316 = vadd.f32 0.0, %v315
        %v317 = vpop.f32.mrf.mxu0
        %318 = vmatprep.mubr.f32.mxu0 0.0
        %319 = vmatmul.mubr.f32.gmra.mxu0 %v202
        %v320 = vpop.f32.mrf.mxu0
        %v321 = vadd.f32 0.0, %v320
        %v322 = vpop.f32.mrf.mxu0
        %323 = vmatprep.mubr.f32.mxu0 0.0
        %324 = vmatmul.mubr.f32.gmra.mxu0 %v203
        %v325 = vpop.f32.mrf.mxu0
        %v326 = vadd.f32 0.0, %v325
        %v327 = vpop.f32.mrf.mxu0
        %328 = vmatprep.mubr.f32.mxu0 0.0
        %329 = vmatmul.mubr.f32.gmra.mxu0 %v204
        %v330 = vpop.f32.mrf.mxu0
        %v331 = vadd.f32 0.0, %v330
        %v332 = vpop.f32.mrf.mxu0
        %333 = vmatprep.mubr.f32.mxu0 0.0
        %334 = vmatmul.mubr.f32.gmra.mxu0 %v205
        %v335 = vpop.f32.mrf.mxu0
        %v336 = vadd.f32 0.0, %v335
        %v337 = vpop.f32.mrf.mxu0
        %338 = vmatprep.mubr.f32.mxu0 0.0
        %339 = vmatmul.mubr.f32.gmra.mxu0 %v206
        %v340 = vpop.f32.mrf.mxu0
        %v341 = vadd.f32 0.0, %v340
        %v342 = vpop.f32.mrf.mxu0
        %343 = vmatprep.mubr.f32.mxu0 0.0
        %344 = vmatmul.mubr.f32.gmra.mxu0 %v207
        %v345 = vpop.f32.mrf.mxu0
        %v346 = vadd.f32 0.0, %v345
        %v347 = vpop.f32.mrf.mxu0
        %348 = vmatprep.mubr.f32.mxu0 0.0
        %349 = vmatmul.mubr.f32.gmra.mxu0 %v208
        %v350 = vpop.f32.mrf.mxu0
        %v351 = vadd.f32 0.0, %v350
        %v352 = vpop.f32.mrf.mxu0
        %353 = vmatprep.mubr.f32.mxu0 0.0
        %354 = vmatmul.mubr.f32.gmra.mxu0 %v209
        %v355 = vpop.f32.mrf.mxu0
        %v356 = vadd.f32 0.0, %v355
        %v357 = vpop.f32.mrf.mxu0
        %358 = vmatprep.mubr.f32.mxu0 0.0
        %359 = vmatmul.mubr.f32.gmra.mxu0 %v210
        %v360 = vpop.f32.mrf.mxu0
        %v361 = vadd.f32 0.0, %v360
        %v362 = vpop.f32.mrf.mxu0
        %363 = vmatprep.mubr.f32.mxu0 0.0
        %364 = vmatmul.mubr.f32.gmra.mxu0 %v211
        %v365 = vpop.f32.mrf.mxu0
        %v366 = vadd.f32 0.0, %v365
        %v367 = vpop.f32.mrf.mxu0
        %368 = vmatprep.mubr.f32.mxu0 0.0
        %369 = vmatmul.mubr.f32.gmra.mxu0 %v212
        %v370 = vpop.f32.mrf.mxu0
        %v371 = vadd.f32 0.0, %v370
        %v372 = vpop.f32.mrf.mxu0
        %373 = vdwg.mxu0
        %374 = vst [vmem:[%s194] sm:$0xff] %v296
        %375 = vst [vmem:[%s194 + $0x8] sm:$0xff] %v301
        %376 = vst [vmem:[%s194 + $0x10] sm:$0xff] %v306
        %377 = vst [vmem:[%s194 + $0x18] sm:$0xff] %v311
        %378 = vst [vmem:[%s194 + $0x20] sm:$0xff] %v316
        %379 = vst [vmem:[%s194 + $0x28] sm:$0xff] %v321
        %380 = vst [vmem:[%s194 + $0x30] sm:$0xff] %v326
        %381 = vst [vmem:[%s194 + $0x38] sm:$0xff] %v331
        %382 = vst [vmem:[%s194 + $0x40] sm:$0xff] %v336
        %383 = vst [vmem:[%s194 + $0x48] sm:$0xff] %v341
        %384 = vst [vmem:[%s194 + $0x50] sm:$0xff] %v346
        %385 = vst [vmem:[%s194 + $0x58] sm:$0xff] %v351
        %386 = vst [vmem:[%s194 + $0x60] sm:$0xff] %v356
        %387 = vst [vmem:[%s194 + $0x68] sm:$0xff] %v361
        %388 = vst [vmem:[%s194 + $0x70] sm:$0xff] %v366
        %389 = vst [vmem:[%s194 + $0x78] sm:$0xff] %v371
        %s390 = sand.u32 %s91, 1
        %s391 = scalar_lea.sflag [#allocation4], %s390
        %s392 = sand.u32 %s91, 1
        %s393 = smul.addr %s392, 128
        %s394 = scalar_lea.vmem [#allocation7], %s393
        // Predicated region
        $region37: #{tpu_custom_call.1} parent=27 // pred_check
          %p395 = pneg %p101
        $region38: #{tpu_custom_call.1} parent=27 // pred_check_branch
          %397 = sbr.rel (%p395) target = $region40
        $region39: #{tpu_custom_call.1} parent=27 // pred_region
          %s398 = smul.u32 16, %s25
          %s400 = ssub.s32 2048, 2048
          %401 = vsyncadd %s391, %s400
          %s402 = smul.addr %s24, 16
          %s403 = sadd.s32 %s398, %s402
          %s404 = smul.addr %s403, 128
          %s405 = scalar_lea.hbm %s2, %s404
          %s406 = sshll.u32 %s394, 4
          %s407 = int_to_ptr.vmem [resolvable:$true] %s406
          %412 = dma.vmem_to_hbm [thread:$0]  %s407, 2048, %s405, %s391, 128, 128, 8
        $region40: #{tpu_custom_call.1} parent=27 // pred_fallthru
          _
      $region28: #{tpu_custom_call.1} parent=5 // pred_fallthru
        _
      %p413 = scmp.le.s32.totalorder 2, %s15
      // Predicated region
      $region41: #{tpu_custom_call.1} parent=5 // pred_check
        %p414 = pneg %p413
      $region42: #{tpu_custom_call.1} parent=5 // pred_check_branch
        %416 = sbr.rel (%p414) target = $region44
      $region43: #{tpu_custom_call.1} parent=5 // pred_region
        %s417 = ssub.s32 %s15, 2
        // Predicated region
        $region45: #{tpu_custom_call.1} parent=43 // pred_check
          %p418 = pneg %p107
        $region46: #{tpu_custom_call.1} parent=43 // pred_check_branch
          %420 = sbr.rel (%p418) target = $region48
        $region47: #{tpu_custom_call.1} parent=43 // pred_region
          %s421 = sand.u32 %s92, 1
          %s422 = scalar_lea.sflag [#allocation4], %s421
          %s423 = sand.u32 %s92, 1
          %s424 = smul.addr %s423, 128
          %s425 = scalar_lea.vmem [#allocation7], %s424
          %426 = dma.done %s422, 2048
        $region48: #{tpu_custom_call.1} parent=43 // pred_fallthru
          _
      $region44: #{tpu_custom_call.1} parent=5 // pred_fallthru
        _
    $region6: #{tpu_custom_call.1} parent=1 // loop_footer
      %s19 = sadd.s32 1, %s15
    $region7: #{tpu_custom_call.1} parent=1 // loop_footer_branch
      %14 = sbr.rel target = $region3
    $region8: #{tpu_custom_call.1} parent=1 // loop_exit
      _
    %427 = vsyncpa [#allocation3], 1
    %s428 = scalar_lea.sflag [#allocation3], 1
    %429 = vsyncpa %s428, 1
    %430 = vsyncpa [#allocation6], 1
    %431 = vsyncpa [#allocation4], 1
    %s432 = scalar_lea.sflag [#allocation4], 1
    %433 = vsyncpa %s432, 1

</llo_original>
